<compile_context>
chip_gen: v7x
topology: tpu7x:2x2x1
jax: 0.10.0
libtpu: 0.0.40
codegen_flags: <defaults>
</compile_context>

<pallas_src>
import functools

import jax
import jax.numpy as jnp
import numpy as np
from jax.experimental import pallas as pl
from jax.experimental.pallas import tpu as pltpu

BN_EPS = 1e-5
_LANES = 128


# --------------------------------------------------------------------------- utils
def _pick_tile(s, target):
    """Lane-tile size: full extent if it fits, else a 128-multiple target."""
    target = max(_LANES, (target // _LANES) * _LANES)
    return s if s <= target else target


def _vmem_limit(per_step_bytes):
    """Generation-aware VMEM budget: derived from tile sizes, <= 3/4 of capacity."""
    try:
        cap = int(getattr(pltpu.get_tpu_info(), "vmem_capacity_bytes", 64 << 20))
    except Exception:  # interpret mode / older jax
        cap = 64 << 20
    want = 4 * per_step_bytes + (8 << 20)  # double-buffered tiles + compiler scratch
    return int(min(max(want, 16 << 20), (cap * 3) // 4))


def _bn_scale_shift(s, ss, n, bias, gamma, beta):
    """Training-mode BN affine from accumulated moments of (y - bias)."""
    mu_c = s / n
    var = jnp.maximum(ss / n - mu_c * mu_c, 0.0)  # shift-invariant, clamped
    inv = jax.lax.rsqrt(var + BN_EPS)
    scale = gamma * inv
    shift = beta - (mu_c + bias) * scale
    return scale, shift


# ------------------------------------------------------------------ pass 1: moments
def _conv_moments_kernel(x_ref, w_ref, s_ref, ss_ref, *, valid_cols, tile_n):
    b, t = pl.program_id(0), pl.program_id(1)

    @pl.when((b == 0) & (t == 0))
    def _():
        s_ref[...] = jnp.zeros_like(s_ref)
        ss_ref[...] = jnp.zeros_like(ss_ref)

    # 1x1 conv on the MXU (bf16 operands, f32 accumulate); bias excluded from moments.
    y = jnp.dot(w_ref[...], x_ref[...].astype(jnp.bfloat16),
                preferred_element_type=jnp.float32)              # [C_out, tile_n]
    col = t * tile_n + jax.lax.broadcasted_iota(jnp.int32, (1, tile_n), 1)
    y = jnp.where(col < valid_cols, y, 0.0)                       # mask partial tiles
    s_ref[...] += jnp.sum(y, axis=1, keepdims=True)
    ss_ref[...] += jnp.sum(y * y, axis=1, keepdims=True)


def _conv_moments(inp, w_bf16, tile_target):
    B, Cin, S = inp.shape
    Cout = w_bf16.shape[0]
    tn = _pick_tile(S, tile_target)
    grid = (B, pl.cdiv(S, tn))
    per_step = Cin * tn * inp.dtype.itemsize + Cout * Cin * 2
    kern = functools.partial(_conv_moments_kernel, valid_cols=S, tile_n=tn)
    const = lambda b, t: (0, 0)
    return pl.pallas_call(
        kern,
        out_shape=(jax.ShapeDtypeStruct((Cout, 1), jnp.float32),
                   jax.ShapeDtypeStruct((Cout, 1), jnp.float32)),
        grid_spec=pltpu.PrefetchScalarGridSpec(
            num_scalar_prefetch=0,
            grid=grid,
            in_specs=[
                pl.BlockSpec((pl.Squeezed(), Cin, tn), lambda b, t: (b, 0, t)),
                pl.BlockSpec((Cout, Cin), const),
            ],
            out_specs=[
                pl.BlockSpec((Cout, 1), const),
                pl.BlockSpec((Cout, 1), const),
            ],
        ),
        compiler_params=pltpu.CompilerParams(
            dimension_semantics=("arbitrary", "arbitrary"),
            vmem_limit_bytes=_vmem_limit(per_step),
        ),
    )(inp, w_bf16)


# --------------------------------------------------------------------- pass 2: main
def _gate_main_kernel(g_ref, xc_ref, wg_ref, bg_ref, gsc_ref, gsh_ref,
                      wx_ref, bx_ref, xsc_ref, xsh_ref, wp_ref, bp_ref,
                      yp_ref, ps_ref, pss_ref, *, valid_cols, tile_n):
    b, t = pl.program_id(0), pl.program_id(1)

    @pl.when((b == 0) & (t == 0))
    def _():
        ps_ref[...] = jnp.zeros_like(ps_ref)
        pss_ref[...] = jnp.zeros_like(pss_ref)

    # W_g / W_x 1x1 convs on the MXU + BN affine (f32 VPU math).
    g1 = jnp.dot(wg_ref[...], g_ref[...].astype(jnp.bfloat16),
                 preferred_element_type=jnp.float32) + bg_ref[...]
    g1 = g1 * gsc_ref[...] + gsh_ref[...]
    x1 = jnp.dot(wx_ref[...], xc_ref[...].astype(jnp.bfloat16),
                 preferred_element_type=jnp.float32) + bx_ref[...]
    x1 = x1 * xsc_ref[...] + xsh_ref[...]
    pre = jnp.maximum(g1 + x1, 0.0)                               # [F_int, tile_n]

    # psi 1x1 conv has C_out == 1: keep it off the MXU (VPU multiply + sublane reduce).
    yp = jnp.sum(wp_ref[...] * pre, axis=0, keepdims=True)        # [1, tile_n], bias-free
    yp_ref[...] = (yp + bp_ref[...]).astype(yp_ref.dtype)

    col = t * tile_n + jax.lax.broadcasted_iota(jnp.int32, (1, tile_n), 1)
    ypm = jnp.where(col < valid_cols, yp, 0.0)
    ps_ref[...] += jnp.sum(ypm, axis=1, keepdims=True)
    pss_ref[...] += jnp.sum(ypm * ypm, axis=1, keepdims=True)


def _gate_main(g3, xc3, wg_b, bg, gsc, gsh, wx_b, bx, xsc, xsh, wp_col, bp, tile_target):
    B, Fg, S = g3.shape
    Fl = xc3.shape[1]
    Fint = wg_b.shape[0]
    tn = _pick_tile(S, tile_target)
    grid = (B, pl.cdiv(S, tn))
    per_step = (Fg * tn * g3.dtype.itemsize + Fl * tn * xc3.dtype.itemsize
                + tn * 4 + 2 * Fint * tn * 4)
    kern = functools.partial(_gate_main_kernel, valid_cols=S, tile_n=tn)
    const = lambda b, t: (0, 0)
    return pl.pallas_call(
        kern,
        out_shape=(jax.ShapeDtypeStruct((B, 1, S), jnp.float32),
                   jax.ShapeDtypeStruct((1, 1), jnp.float32),
                   jax.ShapeDtypeStruct((1, 1), jnp.float32)),
        grid_spec=pltpu.PrefetchScalarGridSpec(
            num_scalar_prefetch=0,
            grid=grid,
            in_specs=[
                pl.BlockSpec((pl.Squeezed(), Fg, tn), lambda b, t: (b, 0, t)),
                pl.BlockSpec((pl.Squeezed(), Fl, tn), lambda b, t: (b, 0, t)),
                pl.BlockSpec((Fint, Fg), const),
                pl.BlockSpec((Fint, 1), const),
                pl.BlockSpec((Fint, 1), const),
                pl.BlockSpec((Fint, 1), const),
                pl.BlockSpec((Fint, Fl), const),
                pl.BlockSpec((Fint, 1), const),
                pl.BlockSpec((Fint, 1), const),
                pl.BlockSpec((Fint, 1), const),
                pl.BlockSpec((Fint, 1), const),
                pl.BlockSpec((1, 1), const),
            ],
            out_specs=[
                pl.BlockSpec((pl.Squeezed(), 1, tn), lambda b, t: (b, 0, t)),
                pl.BlockSpec((1, 1), const),
                pl.BlockSpec((1, 1), const),
            ],
        ),
        compiler_params=pltpu.CompilerParams(
            dimension_semantics=("arbitrary", "arbitrary"),
            vmem_limit_bytes=_vmem_limit(per_step),
        ),
    )(g3, xc3, wg_b, bg, gsc, gsh, wx_b, bx, xsc, xsh, wp_col, bp)


# ----------------------------------------------------------------- pass 3: epilogue
def _gate_epilogue_kernel(yp_ref, sc_ref, sh_ref, o_ref):
    o_ref[...] = jax.nn.sigmoid(yp_ref[...] * sc_ref[...] + sh_ref[...]).astype(o_ref.dtype)


def _gate_epilogue(yp, p_scale, p_shift, tile_target):
    B, _, S = yp.shape
    tn = _pick_tile(S, tile_target)
    grid = (B, pl.cdiv(S, tn))
    const = lambda b, t: (0, 0)
    return pl.pallas_call(
        _gate_epilogue_kernel,
        out_shape=jax.ShapeDtypeStruct((B, 1, S), jnp.float32),
        grid_spec=pltpu.PrefetchScalarGridSpec(
            num_scalar_prefetch=0,
            grid=grid,
            in_specs=[
                pl.BlockSpec((pl.Squeezed(), 1, tn), lambda b, t: (b, 0, t)),
                pl.BlockSpec((1, 1), const),
                pl.BlockSpec((1, 1), const),
            ],
            out_specs=pl.BlockSpec((pl.Squeezed(), 1, tn), lambda b, t: (b, 0, t)),
        ),
        compiler_params=pltpu.CompilerParams(
            dimension_semantics=("parallel", "parallel"),
            vmem_limit_bytes=_vmem_limit(2 * tn * 4),
        ),
    )(yp, p_scale, p_shift)


# -------------------------------------------------------------------- public wrapper
def attention_gate(g, x, params, *, tile_n=512):
    """g: [B, F_g, H, W], x: [B, F_l, H', W'] with H' >= H, W' >= W. Returns [B, 1, H, W]."""
    (wg, bg, gg, btg, wx, bx, gx, btx, wp, bp, gp, btp) = params
    B, Fg, H, W = g.shape
    Bx, Fl, Hx, Wx = x.shape
    assert B == Bx
    if Hx < H or Wx < W:
        # TODO(synk): bilinear-interpolation fallback (diff < 0 branch) not implemented.
        raise NotImplementedError("x must be spatially >= g")

    dy, dx = Hx - H, Wx - W
    y0, x0 = dy // 2, dx // 2
    S, Sx = H * W, Hx * Wx

    # Natural-layout views (free reshapes, no wrapper transposes).
    g3 = g.reshape(B, Fg, S)
    xf3 = x.reshape(B, Fl, Sx)
    # Centre crop of x must be materialised (strided rows); write it as bf16 since the
    # main pass consumes it as an MXU operand anyway -> halves that copy's bytes.
    xc3 = x[:, :, y0:y0 + H, x0:x0 + W].astype(jnp.bfloat16).reshape(B, Fl, S)

    # Conv weights as bf16 MXU operands ([C_out, C_in], PyTorch layout).  Activations
    # are cast per-tile inside the kernels: each slab is only read 1-2x from HBM, so a
    # wrapper-side cast pass would cost more HBM bandwidth than it saves.
    wg_b = wg.astype(jnp.bfloat16)
    wx_b = wx.astype(jnp.bfloat16)
    wp_col = wp.T.astype(jnp.float32)  # [F_int, 1] column for the VPU psi reduce

    # Pass 1: per-channel moments of the bias-free 1x1 conv outputs (full maps).
    sg, ssg = _conv_moments(g3, wg_b, tile_n)
    sx, ssx = _conv_moments(xf3, wx_b, tile_n)
    gsc, gsh = _bn_scale_shift(sg, ssg, float(B * S), bg, gg, btg)
    xsc, xsh = _bn_scale_shift(sx, ssx, float(B * Sx), bx, gx, btx)

    # Pass 2: conv + BN + relu + psi projection; accumulate psi moments.
    yp, ps, pss = _gate_main(g3, xc3, wg_b, bg, gsc, gsh, wx_b, bx, xsc, xsh,
                             wp_col, bp, tile_n)
    psc, psh = _bn_scale_shift(ps, pss, float(B * S), bp, gp, btp)

    # Pass 3: psi BN + sigmoid.
    out = _gate_epilogue(yp, psc, psh, tile_n)
    return out.reshape(B, 1, H, W)


# -------------------------------------------------------------- params / reference
def make_params(key, F_g, F_l, F_int):
    ks = jax.random.split(key, 6)
    wg = jax.random.normal(ks[0], (F_int, F_g), jnp.float32) / np.sqrt(F_g)
    bg = jax.random.normal(ks[1], (F_int, 1), jnp.float32) * 0.1
    wx = jax.random.normal(ks[2], (F_int, F_l), jnp.float32) / np.sqrt(F_l)
    bx = jax.random.normal(ks[3], (F_int, 1), jnp.float32) * 0.1
    wp = jax.random.normal(ks[4], (1, F_int), jnp.float32) / np.sqrt(F_int)
    bp = jax.random.normal(ks[5], (1, 1), jnp.float32) * 0.1
    gg, btg = jnp.ones((F_int, 1), jnp.float32), jnp.zeros((F_int, 1), jnp.float32)
    gx, btx = jnp.ones((F_int, 1), jnp.float32), jnp.zeros((F_int, 1), jnp.float32)
    gp, btp = jnp.ones((1, 1), jnp.float32), jnp.zeros((1, 1), jnp.float32)
    return (wg, bg, gg, btg, wx, bx, gx, btx, wp, bp, gp, btp)


def attention_gate_reference(g, x, params):
    (wg, bg, gg, btg, wx, bx, gx, btx, wp, bp, gp, btp) = params

    def conv_bn(inp, w, b, gamma, beta):
        y = jnp.einsum("oc,bchw->bohw", w, inp) + b[:, 0][None, :, None, None]
        mu = jnp.mean(y, axis=(0, 2, 3), keepdims=True)
        var = jnp.mean((y - mu) ** 2, axis=(0, 2, 3), keepdims=True)
        y = (y - mu) / jnp.sqrt(var + BN_EPS)
        return y * gamma[:, 0][None, :, None, None] + beta[:, 0][None, :, None, None]

    g1 = conv_bn(g, wg, bg, gg, btg)
    x1 = conv_bn(x, wx, bx, gx, btx)
    H, W = g.shape[2], g.shape[3]
    Hx, Wx = x.shape[2], x.shape[3]
    dy, dx = Hx - H, Wx - W
    x1c = x1[:, :, dy // 2:Hx - (dy - dy // 2), dx // 2:Wx - (dx - dx // 2)]
    pre = jnp.maximum(g1 + x1c, 0.0)
    psi = conv_bn(pre, wp, bp, gp, btp)
    return jax.nn.sigmoid(psi)


if __name__ == "__main__":
    B, F_g, F_l, F_int = 2, 4, 6, 8
    H, W = 16, 16
    Hx, Wx = 24, 24  # skip connection is larger -> exercises centre-crop + partial-tile paths

    key = jax.random.PRNGKey(0)
    kg, kx, kp = jax.random.split(key, 3)
    g = jax.random.normal(kg, (B, F_g, H, W), jnp.float32)
    x = jax.random.normal(kx, (B, F_l, Hx, Wx), jnp.float32)
    params = make_params(kp, F_g, F_l, F_int)

    out = jax.block_until_ready(attention_gate(g, x, params))
    ref = jax.block_until_ready(attention_gate_reference(g, x, params))
    # bf16 MXU operands (f32 accumulate / f32 BN math) -> loosened tolerance vs f32 ref.
    np.testing.assert_allclose(np.asarray(out), np.asarray(ref), rtol=2e-2, atol=2e-2)
    assert out.shape == (B, 1, H, W)

    print("KERNEL_OK")
</pallas_src>

<mosaic_0001>
module attributes {stable_mosaic.version = 11 : i64} {
  func.func @_conv_moments_kernel(%arg0: i32, %arg1: i32, %arg2: memref<1x4x256xf32, #tpu.memory_space<vmem>>, %arg3: memref<8x4xbf16, #tpu.memory_space<vmem>>, %arg4: memref<8x1xf32, #tpu.memory_space<vmem>>, %arg5: memref<8x1xf32, #tpu.memory_space<vmem>>) attributes {dimension_semantics = [#tpu.dimension_semantics<arbitrary>, #tpu.dimension_semantics<arbitrary>], iteration_bounds = array<i64: 2, 1>, scalar_prefetch = 0 : i64, scratch_operands = 0 : i64, tpu.core_type = #tpu.core_type<tc>, window_params = [{transform_indices = @transform_0, window_bounds = array<i64: 1, 4, 256>}, {pipeline_mode = #tpu.pipeline_mode<synchronous>, transform_indices = @transform_1, window_bounds = array<i64: 8, 4>}, {pipeline_mode = #tpu.pipeline_mode<synchronous>, transform_indices = @transform_2, window_bounds = array<i64: 8, 1>}, {pipeline_mode = #tpu.pipeline_mode<synchronous>, transform_indices = @transform_3, window_bounds = array<i64: 8, 1>}]} {
    %c0_i32 = arith.constant 0 : i32
    %0 = arith.cmpi eq, %arg0, %c0_i32 : i32
    %c0_i32_0 = arith.constant 0 : i32
    %1 = arith.cmpi eq, %arg1, %c0_i32_0 : i32
    %2 = arith.andi %0, %1 : i1
    %3 = arith.extui %2 : i1 to i32
    %c0_i32_1 = arith.constant 0 : i32
    %4 = arith.cmpi ne, %3, %c0_i32_1 : i32
    scf.if %4 {
      %cst_18 = arith.constant 0.000000e+00 : f32
      %31 = vector.broadcast %cst_18 : f32 to vector<8x1xf32>
      %c0_19 = arith.constant 0 : index
      %c0_20 = arith.constant 0 : index
      %32 = vector.load %arg4[%c0_19, %c0_20] : memref<8x1xf32, #tpu.memory_space<vmem>>, vector<8x1xf32>
      tpu.vector_store %arg4[%c0_19, %c0_20], %31 {strides = array<i32>} : memref<8x1xf32, #tpu.memory_space<vmem>>, vector<8x1xf32>,
      %cst_21 = arith.constant 0.000000e+00 : f32
      %33 = vector.broadcast %cst_21 : f32 to vector<8x1xf32>
      %c0_22 = arith.constant 0 : index
      %c0_23 = arith.constant 0 : index
      %34 = vector.load %arg5[%c0_22, %c0_23] : memref<8x1xf32, #tpu.memory_space<vmem>>, vector<8x1xf32>
      tpu.vector_store %arg5[%c0_22, %c0_23], %33 {strides = array<i32>} : memref<8x1xf32, #tpu.memory_space<vmem>>, vector<8x1xf32>,
    } else {
    }
    %c0 = arith.constant 0 : index
    %c0_2 = arith.constant 0 : index
    %5 = vector.load %arg3[%c0, %c0_2] : memref<8x4xbf16, #tpu.memory_space<vmem>>, vector<8x4xbf16>
    %c0_3 = arith.constant 0 : index
    %c0_4 = arith.constant 0 : index
    %c0_5 = arith.constant 0 : index
    %6 = vector.load %arg2[%c0_3, %c0_4, %c0_5] : memref<1x4x256xf32, #tpu.memory_space<vmem>>, vector<1x4x256xf32>
    %7 = vector.shape_cast %6 : vector<1x4x256xf32> to vector<4x256xf32>
    %8 = arith.truncf %7 : vector<4x256xf32> to vector<4x256xbf16>
    %cst = arith.constant dense<0.000000e+00> : vector<8x256xf32>
    %9 = tpu.matmul %5, %8, %cst {dimension_numbers = #tpu.dot_dimension_numbers<[1], [0], [0], [1], [0, 0, 1, 1], [], []>} : vector<8x4xbf16>, vector<4x256xbf16>, vector<8x256xf32> -> vector<8x256xf32>
    %c256_i32 = arith.constant 256 : i32
    %10 = arith.muli %arg1, %c256_i32 : i32
    %11 = tpu.iota {dimensions = array<i32: 1>} : vector<1x256xi32>
    %12 = vector.broadcast %10 : i32 to vector<1x256xi32>
    %13 = arith.addi %12, %11 : vector<1x256xi32>
    %c256_i32_6 = arith.constant 256 : i32
    %14 = vector.broadcast %c256_i32_6 : i32 to vector<1x256xi32>
    %15 = arith.cmpi slt, %13, %14 : vector<1x256xi32>
    %cst_7 = arith.constant 0.000000e+00 : f32
    %16 = vector.shape_cast %15 : vector<1x256xi1> to vector<1x256xi1>
    %17 = vector.broadcast %16 : vector<1x256xi1> to vector<8x256xi1>
    %18 = vector.broadcast %cst_7 : f32 to vector<8x256xf32>
    %19 = arith.select %17, %9, %18 : vector<8x256xi1>, vector<8x256xf32>
    %c0_8 = arith.constant 0 : index
    %c0_9 = arith.constant 0 : index
    %20 = vector.load %arg4[%c0_8, %c0_9] : memref<8x1xf32, #tpu.memory_space<vmem>>, vector<8x1xf32>
    %cst_10 = arith.constant dense<0.000000e+00> : vector<8xf32>
    %21 = vector.multi_reduction <add>, %19, %cst_10 [1] : vector<8x256xf32> to vector<8xf32>
    %22 = vector.shape_cast %21 : vector<8xf32> to vector<8x1xf32>
    %23 = arith.addf %20, %22 : vector<8x1xf32>
    %c0_11 = arith.constant 0 : index
    %c0_12 = arith.constant 0 : index
    %24 = vector.load %arg4[%c0_11, %c0_12] : memref<8x1xf32, #tpu.memory_space<vmem>>, vector<8x1xf32>
    tpu.vector_store %arg4[%c0_11, %c0_12], %23 {strides = array<i32>} : memref<8x1xf32, #tpu.memory_space<vmem>>, vector<8x1xf32>,
    %c0_13 = arith.constant 0 : index
    %c0_14 = arith.constant 0 : index
    %25 = vector.load %arg5[%c0_13, %c0_14] : memref<8x1xf32, #tpu.memory_space<vmem>>, vector<8x1xf32>
    %26 = arith.mulf %19, %19 : vector<8x256xf32>
    %cst_15 = arith.constant dense<0.000000e+00> : vector<8xf32>
    %27 = vector.multi_reduction <add>, %26, %cst_15 [1] : vector<8x256xf32> to vector<8xf32>
    %28 = vector.shape_cast %27 : vector<8xf32> to vector<8x1xf32>
    %29 = arith.addf %25, %28 : vector<8x1xf32>
    %c0_16 = arith.constant 0 : index
    %c0_17 = arith.constant 0 : index
    %30 = vector.load %arg5[%c0_16, %c0_17] : memref<8x1xf32, #tpu.memory_space<vmem>>, vector<8x1xf32>
    tpu.vector_store %arg5[%c0_16, %c0_17], %29 {strides = array<i32>} : memref<8x1xf32, #tpu.memory_space<vmem>>, vector<8x1xf32>,
    return
  }
  func.func @transform_0(%arg0: i32, %arg1: i32) -> (i32, i32, i32) {
    %c0_i32 = arith.constant 0 : i32
    %c0_i32_0 = arith.constant 0 : i32
    return %arg0, %c0_i32, %arg1 : i32, i32, i32
  }
  func.func @transform_1(%arg0: i32, %arg1: i32) -> (i32, i32) {
    %c0_i32 = arith.constant 0 : i32
    %c0_i32_0 = arith.constant 0 : i32
    %c0_i32_1 = arith.constant 0 : i32
    return %c0_i32, %c0_i32_0 : i32, i32
  }
  func.func @transform_2(%arg0: i32, %arg1: i32) -> (i32, i32) {
    %c0_i32 = arith.constant 0 : i32
    %c0_i32_0 = arith.constant 0 : i32
    %c0_i32_1 = arith.constant 0 : i32
    return %c0_i32, %c0_i32_0 : i32, i32
  }
  func.func @transform_3(%arg0: i32, %arg1: i32) -> (i32, i32) {
    %c0_i32 = arith.constant 0 : i32
    %c0_i32_0 = arith.constant 0 : i32
    %c0_i32_1 = arith.constant 0 : i32
    return %c0_i32, %c0_i32_0 : i32, i32
  }
}

</mosaic_0001>

<llo_original>
// kernel: tpu_custom_call.1
$region0: #{tpu_custom_call.1}
  #allocation0 [shape = 'u32[]', space=smem, size = 0x4, offset = 0x4, fixed_abs, tag = 'smem constant byte address 0x4 - core index']
  #allocation1 [shape = 'u32[144,128]{1,0:T(1,128)}', space=vmem, size = 0x12000, scoped, tag = 'internal scratch']
  %s0 = inlined_call_operand.hbm [shape: f32[2,4,256], index: 0, kind: input, shape index: {}]
  %s1 = inlined_call_operand.vmem [shape: bf16[8,4], index: 1, kind: input, shape index: {}]
  %s2 = inlined_call_operand.vmem [shape: f32[8,1], index: 2, kind: output, shape index: {0}]
  %s3 = inlined_call_operand.vmem [shape: f32[8,1], index: 3, kind: output, shape index: {1}]
  %4 = xla_tuple %s2, %s3
  %s5 = sld [smem:[#allocation0]]
  $region57: #{tpu_custom_call.1} parent=0
    _
  %s7 = ssub.s32 1, %s5
  %s8 = scalar_select 0, %s7, %s5
  $region1: #{tpu_custom_call.1} parent=0
    #allocation2 [shape = 'u8[8192]{0}', space=vmem, size = 0x2000, scoped, tag = 'input window, operand 0']
    #allocation3 [shape = 's32[2]{0}', space=sflag, size = 0x8, scoped, tag = 'scoped memory for tpu_custom_call.1']
    %9 = vsyncpa [#allocation3], 0
    %s10 = scalar_lea.sflag [#allocation3], 1
    %11 = vsyncpa %s10, 0
    loop: start=0, step=1, limit=4
    $region2: #{tpu_custom_call.1} parent=1 // loop_pre_header
      _
    $region3: #{tpu_custom_call.1} parent=1 // loop_header
      %s13 = sphi 0, %s17
      %p14 = scmp.ge.s32.totalorder %s13, 4
      %s20 = sphi 0, %s32
      %s21 = sphi 0, %s28
      %s22 = sphi 0, %s20
      %s23 = sphi 0, %s21
      %s24 = sphi 0, %s22
      %s25 = sphi 0, %s23
      %s37 = sphi 0, %s39
      %s40 = sphi 0, %s37
      %s41 = sphi 0, %s40
      %s57 = sphi 0, %s41
      %s61 = sphi 0, %s61
      %s63 = sphi 0, %s61
      %s64 = sphi 0, %s63
      %s78 = sphi 0, %s64
      %s82 = sphi 0, %s82
      %s84 = sphi 0, %s82
      %s85 = sphi 0, %s84
      %s99 = sphi 0, %s85
      %s103 = sphi 0, %s103
      %s105 = sphi 0, %s103
      %s106 = sphi 0, %s105
      %s120 = sphi 0, %s106
    $region4: #{tpu_custom_call.1} parent=1 // loop_header_branch
      %16 = sbr.rel (%p14) target = $region8
    $region5: #{tpu_custom_call.1} parent=1 // loop_body
      %s18 = ssub.s32 %s13, 1
      %s19 = ssub.s32 %s13, 2
      %s26 = sadd.s32 1, %s21
      %p27 = scmp.ge.s32.totalorder %s26, 1
      %s28 = scalar_select %p27, 0, %s26
      %s29 = sadd.s32 1, %s20
      %s30 = scalar_select %p27, %s29, %s20
      %p31 = scmp.ge.s32.totalorder %s30, 2
      %s32 = scalar_select %p31, 0, %s30
      %s33 = ssub.s32 %s20, %s32
      %s34 = ssub.s32 %s21, %s28
      %s35 = sor.u32 %s33, %s34
      %p36 = scmp.eq.s32.totalorder %s35, 0
      %s38 = sadd.s32 %s37, 1
      %s39 = scalar_select %p36, %s37, %s38
      %p42 = pneg %p36
      %p43 = scmp.eq.s32.totalorder %s13, 1
      %p44 = por %p42, %p43
      %p45 = scmp.ne.s32.totalorder %s37, %s40
      %p46 = scmp.eq.s32.totalorder %s13, 0
      %p47 = por %p45, %p46
      %p48 = scmp.ne.s32.totalorder %s37, %s40
      %p49 = scmp.eq.s32.totalorder %s18, 1
      %p50 = por %p48, %p49
      %p51 = scmp.ne.s32.totalorder %s40, %s41
      %p52 = scmp.eq.s32.totalorder %s18, 0
      %p53 = por %p51, %p52
      %p54 = scmp.ne.s32.totalorder %s40, %s41
      %p55 = scmp.eq.s32.totalorder %s19, 1
      %p56 = por %p54, %p55
      %p58 = scmp.ne.s32.totalorder %s41, %s57
      %p59 = scmp.eq.s32.totalorder %s19, 0
      %p60 = por %p58, %p59
      %s62 = sadd.s32 %s61, 1
      %p65 = scmp.eq.s32.totalorder %s13, 1
      %p66 = scmp.ne.s32.totalorder %s61, %s63
      %p67 = scmp.eq.s32.totalorder %s13, 0
      %p68 = por %p66, %p67
      %p69 = scmp.ne.s32.totalorder %s61, %s63
      %p70 = scmp.eq.s32.totalorder %s18, 1
      %p71 = por %p69, %p70
      %p72 = scmp.ne.s32.totalorder %s63, %s64
      %p73 = scmp.eq.s32.totalorder %s18, 0
      %p74 = por %p72, %p73
      %p75 = scmp.ne.s32.totalorder %s63, %s64
      %p76 = scmp.eq.s32.totalorder %s19, 1
      %p77 = por %p75, %p76
      %p79 = scmp.ne.s32.totalorder %s64, %s78
      %p80 = scmp.eq.s32.totalorder %s19, 0
      %p81 = por %p79, %p80
      %s83 = sadd.s32 %s82, 1
      %p86 = scmp.eq.s32.totalorder %s13, 1
      %p87 = scmp.ne.s32.totalorder %s82, %s84
      %p88 = scmp.eq.s32.totalorder %s13, 0
      %p89 = por %p87, %p88
      %p90 = scmp.ne.s32.totalorder %s82, %s84
      %p91 = scmp.eq.s32.totalorder %s18, 1
      %p92 = por %p90, %p91
      %p93 = scmp.ne.s32.totalorder %s84, %s85
      %p94 = scmp.eq.s32.totalorder %s18, 0
      %p95 = por %p93, %p94
      %p96 = scmp.ne.s32.totalorder %s84, %s85
      %p97 = scmp.eq.s32.totalorder %s19, 1
      %p98 = por %p96, %p97
      %p100 = scmp.ne.s32.totalorder %s85, %s99
      %p101 = scmp.eq.s32.totalorder %s19, 0
      %p102 = por %p100, %p101
      %s104 = sadd.s32 %s103, 1
      %p107 = scmp.eq.s32.totalorder %s13, 1
      %p108 = scmp.ne.s32.totalorder %s103, %s105
      %p109 = scmp.eq.s32.totalorder %s13, 0
      %p110 = por %p108, %p109
      %p111 = scmp.ne.s32.totalorder %s103, %s105
      %p112 = scmp.eq.s32.totalorder %s18, 1
      %p113 = por %p111, %p112
      %p114 = scmp.ne.s32.totalorder %s105, %s106
      %p115 = scmp.eq.s32.totalorder %s18, 0
      %p116 = por %p114, %p115
      %p117 = scmp.ne.s32.totalorder %s105, %s106
      %p118 = scmp.eq.s32.totalorder %s19, 1
      %p119 = por %p117, %p118
      %p121 = scmp.ne.s32.totalorder %s106, %s120
      %p122 = scmp.eq.s32.totalorder %s19, 0
      %p123 = por %p121, %p122
      %p124 = scmp.le.s32.totalorder 1, %s13
      %p125 = scmp.lt.s32.totalorder %s13, 3
      %p126 = pnand %p124, %p125
      %p127 = pneg %p126
      // Predicated region
      $region9: #{tpu_custom_call.1} parent=5 // pred_check
        _
      $region10: #{tpu_custom_call.1} parent=5 // pred_check_branch
        %129 = sbr.rel (%p126) target = $region12
      $region11: #{tpu_custom_call.1} parent=5 // pred_region
        %s130 = ssub.s32 %s13, 1
        // Predicated region
        $region13: #{tpu_custom_call.1} parent=11 // pred_check
          %p131 = pneg %p74
        $region14: #{tpu_custom_call.1} parent=11 // pred_check_branch
          %133 = sbr.rel (%p131) target = $region16
        $region15: #{tpu_custom_call.1} parent=11 // pred_region
          _
        $region16: #{tpu_custom_call.1} parent=11 // pred_fallthru
          _
      $region12: #{tpu_custom_call.1} parent=5 // pred_fallthru
        _
      %p134 = scmp.lt.s32.totalorder %s13, 2
      // Predicated region
      $region17: #{tpu_custom_call.1} parent=5 // pred_check
        %p135 = pneg %p134
      $region18: #{tpu_custom_call.1} parent=5 // pred_check_branch
        %137 = sbr.rel (%p135) target = $region20
      $region19: #{tpu_custom_call.1} parent=5 // pred_region
        // Predicated region
        $region21: #{tpu_custom_call.1} parent=19 // pred_check
          %p138 = pneg %p47
        $region22: #{tpu_custom_call.1} parent=19 // pred_check_branch
          %140 = sbr.rel (%p138) target = $region24
        $region23: #{tpu_custom_call.1} parent=19 // pred_region
          %s141 = sand.u32 %s37, 1
          %s142 = scalar_lea.sflag [#allocation3], %s141
          %s143 = sand.u32 %s37, 1
          %s144 = smul.addr %s143, 8
          %s145 = scalar_lea.vmem [#allocation2], %s144
          %s146 = smul.u32 2, %s21
          %s148 = ssub.s32 128, 128
          %149 = vsyncadd %s142, %s148
          %s150 = smul.addr %s20, 2
          %s151 = sadd.s32 %s146, %s150
          %s152 = smul.addr %s151, 64
          %s153 = scalar_lea.hbm %s0, %s152
          %s155 = sshll.u32 %s145, 4
          %s156 = int_to_ptr.vmem [resolvable:$true] %s155
          %158 = dma.hbm_to_vmem [thread:$0]  %s153, 128, %s156, %s142
        $region24: #{tpu_custom_call.1} parent=19 // pred_fallthru
          _
      $region20: #{tpu_custom_call.1} parent=5 // pred_fallthru
        _
      %p159 = scmp.le.s32.totalorder 1, %s13
      %p160 = scmp.lt.s32.totalorder %s13, 3
      %p161 = pnand %p159, %p160
      %p162 = pneg %p161
      // Predicated region
      $region25: #{tpu_custom_call.1} parent=5 // pred_check
        _
      $region26: #{tpu_custom_call.1} parent=5 // pred_check_branch
        %164 = sbr.rel (%p161) target = $region28
      $region27: #{tpu_custom_call.1} parent=5 // pred_region
        %s165 = ssub.s32 %s13, 1
        %s166 = sand.u32 %s40, 1
        %s167 = scalar_lea.sflag [#allocation3], %s166
        %s168 = sand.u32 %s40, 1
        %s169 = smul.addr %s168, 8
        %s170 = scalar_lea.vmem [#allocation2], %s169
        // Predicated region
        $region29: #{tpu_custom_call.1} parent=27 // pred_check
          %p171 = pneg %p53
        $region30: #{tpu_custom_call.1} parent=27 // pred_check_branch
          %173 = sbr.rel (%p171) target = $region32
        $region31: #{tpu_custom_call.1} parent=27 // pred_region
          %174 = dma.done %s167, 128
        $region32: #{tpu_custom_call.1} parent=27 // pred_fallthru
          _
        %s175 = sand.u32 %s40, 1
        %s176 = scalar_lea.sflag [#allocation3], %s175
        %s177 = sand.u32 %s40, 1
        %s178 = smul.addr %s177, 8
        %s179 = scalar_lea.vmem [#allocation2], %s178
        %p180 = pneg %p53
        %p181 = pneg %p50
        %p182 = pneg %p74
        %p183 = pneg %p71
        %p184 = pneg %p95
        %p185 = pneg %p92
        %p186 = pneg %p116
        %p187 = pneg %p113
        %s188 = smul.u32 2, %s23
        %p190 = scmp.eq.s32.totalorder %s22, 0
        %p191 = scmp.eq.s32.totalorder %s23, 0
        %p192 = pnand %p190, %p191
        %p193 = pneg %p192
        // Predicated region
        $region33: #{tpu_custom_call.1} parent=27 // pred_check
          _
        $region34: #{tpu_custom_call.1} parent=27 // pred_check_branch
          %195 = sbr.rel (%p192) target = $region36
        $region35: #{tpu_custom_call.1} parent=27 // pred_region
          %vm196 = vcmask 7168
          %197 = vst.msk [vmem:[%s2] sm:$0xff] %vm196, 0.0
          %198 = vst.msk [vmem:[%s3] sm:$0xff] %vm196, 0.0
        $region36: #{tpu_custom_call.1} parent=27 // pred_fallthru
          _
        %v199 = vld [vmem:[%s1] sm:$0xf]
        %v200 = vld [vmem:[%s170] sm:$0xff]
        %v202 = vcombine.high %v200, %v200
        %v204 = vpack.c.bf16 %v200, %v200
        %v205 = vpack.c.bf16 %v202, %v202
        %vm206 = vcmask 31744
        %v208 = vsel %vm206, %v199, 0
        %vm210 = vcmask 1041408
        %v212 = vsel %vm210, %v204, 0
        %v215 = vsel %vm210, %v205, 0
        %217 = vmatprep.subr.bf16.mxu0 %v215
        %218 = vmatpush1.bf16.msra.mxu0 %v212
        %219 = vmatprep.subr.bf16.mxu0 0
        %220 = vmatpush1.bf16.msra.mxu0 0
        %221 = vmatprep.subr.bf16.mxu0 0
        %222 = vmatpush1.bf16.msra.mxu0 0
        %223 = vmatprep.subr.bf16.mxu0 0
        %224 = vmatpush1.bf16.msra.mxu0 0
        %225 = vmatprep.subr.bf16.mxu0 0
        %226 = vmatpush1.bf16.msra.mxu0 0
        %227 = vmatprep.subr.bf16.mxu0 0
        %228 = vmatpush1.bf16.msra.mxu0 0
        %229 = vmatprep.subr.bf16.mxu0 0
        %230 = vmatpush1.bf16.msra.mxu0 0
        %231 = vmatprep.subr.bf16.mxu0 0
        %232 = vmatpush1.bf16.msra.mxu0 0
        %233 = vmatprep.subr.bf16.mxu0 0
        %234 = vmatpush1.bf16.msra.mxu0 0
        %235 = vmatprep.subr.bf16.mxu0 0
        %236 = vmatpush1.bf16.msra.mxu0 0
        %237 = vmatprep.subr.bf16.mxu0 0
        %238 = vmatpush1.bf16.msra.mxu0 0
        %239 = vmatprep.subr.bf16.mxu0 0
        %240 = vmatpush1.bf16.msra.mxu0 0
        %241 = vmatprep.subr.bf16.mxu0 0
        %242 = vmatpush1.bf16.msra.mxu0 0
        %243 = vmatprep.subr.bf16.mxu0 0
        %244 = vmatpush1.bf16.msra.mxu0 0
        %245 = vmatprep.subr.bf16.mxu0 0
        %246 = vmatpush1.bf16.msra.mxu0 0
        %247 = vmatprep.subr.bf16.mxu0 0
        %248 = vmatpush1.bf16.msra.mxu0 0
        %249 = vmatprep.mubr.bf16.mxu0 0
        %250 = vmatmul.mubr.bf16.gmra.mrb[0].mxu0 %v208
        %v251 = vpop.f32.mrb[0].mxu0
        %v252 = vadd.f32 0.0, %v251
        %v253 = vpop.f32.mrb[0].mxu0
        %v254 = vadd.f32 0.0, %v253
        %v255 = vpop.f32.mrb[0].mxu0
        %v256 = vpop.f32.mrb[0].mxu0
        %257 = vdwg.mxu0
        %s258 = smul.u32 %s23, 256
        %v259 = vlaneseq
        %v260 = vand.u32 %v259, 127
        %v261 = vadd.s32 %v260, 128
        %v262 = vstv %s258
        %v263 = vadd.s32 %v262, %v260
        %v264 = vadd.s32 %v262, %v261
        %vm265 = vcmp.lt.s32.totalorder %v263, 256
        %vm266 = vcmp.lt.s32.totalorder %v264, 256
        %v267 = vsel %vm265, 1, 0
        %v268 = vsel %vm266, 1, 0
        %vm269 = vcmp.eq.s32.totalorder %v267, 1
        %vm270 = vcmp.eq.s32.totalorder %v268, 1
        %v271 = vsel %vm269, %v252, 0.0
        %v272 = vsel %vm270, %v254, 0.0
        %v273 = vld [vmem:[%s2] sm:$0xff]
        %v274 = vadd.f32 %v271, %v272
        %275 = vadd.xlane.f32.xlu0 %v274
        %v276 = vpop.xlane.xlu0 %275
        %v277 = vadd.f32 %v273, %v276
        %vm278 = vcmask 7168
        %279 = vst.msk [vmem:[%s2] sm:$0xff] %vm278, %v277
        %v280 = vld [vmem:[%s3] sm:$0xff]
        %v281 = vmul.f32 %v271, %v271
        %v282 = vmul.f32 %v272, %v272
        %v283 = vadd.f32 %v281, %v282
        %284 = vadd.xlane.f32.xlu0 %v283
        %v285 = vpop.xlane.xlu0 %284
        %v286 = vadd.f32 %v280, %v285
        %287 = vst.msk [vmem:[%s3] sm:$0xff] %vm278, %v286
        // Predicated region
        $region37: #{tpu_custom_call.1} parent=27 // pred_check
          %p288 = pneg %p92
        $region38: #{tpu_custom_call.1} parent=27 // pred_check_branch
          %290 = sbr.rel (%p288) target = $region40
        $region39: #{tpu_custom_call.1} parent=27 // pred_region
          _
        $region40: #{tpu_custom_call.1} parent=27 // pred_fallthru
          _
        // Predicated region
        $region41: #{tpu_custom_call.1} parent=27 // pred_check
          %p291 = pneg %p113
        $region42: #{tpu_custom_call.1} parent=27 // pred_check_branch
          %293 = sbr.rel (%p291) target = $region44
        $region43: #{tpu_custom_call.1} parent=27 // pred_region
          _
        $region44: #{tpu_custom_call.1} parent=27 // pred_fallthru
          _
        // Predicated region
        $region45: #{tpu_custom_call.1} parent=27 // pred_check
          %p294 = pneg %p92
        $region46: #{tpu_custom_call.1} parent=27 // pred_check_branch
          %296 = sbr.rel (%p294) target = $region48
        $region47: #{tpu_custom_call.1} parent=27 // pred_region
          _
        $region48: #{tpu_custom_call.1} parent=27 // pred_fallthru
          _
        // Predicated region
        $region49: #{tpu_custom_call.1} parent=27 // pred_check
          %p297 = pneg %p113
        $region50: #{tpu_custom_call.1} parent=27 // pred_check_branch
          %299 = sbr.rel (%p297) target = $region52
        $region51: #{tpu_custom_call.1} parent=27 // pred_region
          _
        $region52: #{tpu_custom_call.1} parent=27 // pred_fallthru
          _
      $region28: #{tpu_custom_call.1} parent=5 // pred_fallthru
        _
      %p300 = scmp.le.s32.totalorder 2, %s13
      // Predicated region
      $region53: #{tpu_custom_call.1} parent=5 // pred_check
        %p301 = pneg %p300
      $region54: #{tpu_custom_call.1} parent=5 // pred_check_branch
        %303 = sbr.rel (%p301) target = $region56
      $region55: #{tpu_custom_call.1} parent=5 // pred_region
        %s304 = ssub.s32 %s13, 2
      $region56: #{tpu_custom_call.1} parent=5 // pred_fallthru
        _
    $region6: #{tpu_custom_call.1} parent=1 // loop_footer
      %s17 = sadd.s32 1, %s13
    $region7: #{tpu_custom_call.1} parent=1 // loop_footer_branch
      %12 = sbr.rel target = $region3
    $region8: #{tpu_custom_call.1} parent=1 // loop_exit
      _
    %305 = vsyncpa [#allocation3], 1
    %s306 = scalar_lea.sflag [#allocation3], 1
    %307 = vsyncpa %s306, 1

</llo_original>
